<compile_context>
chip_gen: v7x
topology: tpu7x:2x2x1
jax: 0.10.0
libtpu: 0.0.40
codegen_flags: <defaults>
</compile_context>

<pallas_src>
import jax
import jax.numpy as jnp
from jax.experimental import pallas as pl
from jax.experimental.pallas import tpu as pltpu


# ----------------------------- Pallas kernel ------------------------------- #
def _attention_gate_kernel(
    g_ref,      # (1, F_g,  thw)
    x_ref,      # (1, F_l,  thw)
    wg_ref,     # (F_int, F_g)   BN scale folded in
    wx_ref,     # (F_int, F_l)   BN scale folded in
    wpsi_ref,   # (F_int, 1)     BN scale folded in
    b_ref,      # (F_int, 1)     combined bias of both branches
    bpsi_ref,   # (1, 1)         psi-branch bias
    out_ref,    # (1, F_l, thw)
):
    g = g_ref[0].astype(jnp.float32)          # (F_g, thw)
    x = x_ref[0].astype(jnp.float32)          # (F_l, thw)

    # g1 + x1 (+ combined folded-BN bias), channel-major matmuls on the MXU.
    g1 = jnp.dot(wg_ref[...], g, preferred_element_type=jnp.float32)   # (F_int, thw)
    x1 = jnp.dot(wx_ref[...], x, preferred_element_type=jnp.float32)   # (F_int, thw)
    r = jnp.maximum(g1 + x1 + b_ref[...], 0.0)                         # (F_int, thw)

    # psi: 1-output-channel conv == weighted sublane reduce (VPU mul + XLU sum).
    p = jnp.sum(r * wpsi_ref[...], axis=0, keepdims=True) + bpsi_ref[0, 0]  # (1, thw)
    p = jax.nn.sigmoid(p)

    out_ref[0] = (x * p).astype(out_ref.dtype)   # gate broadcast over channels


# --------------------------- host-side helpers ------------------------------ #
def _pick_lane_tile(hw, cap=4096):
    """Largest lane tile that divides hw; multiple of 128 when possible."""
    if hw <= cap or hw % 128 != 0:
        return hw                      # full extent is always a legal block dim
    best = 128
    for t in range(128, cap + 1, 128):
        if hw % t == 0:
            best = t
    return best


def _fold_params(params):
    """Fold eval-mode BN scale/bias into channel-major conv weights."""
    F_int = params["wg"].shape[1]
    sg = params["sg"].reshape(F_int, 1)
    sx = params["sx"].reshape(F_int, 1)
    wg_cm = (params["wg"].T * sg).astype(jnp.float32)          # (F_int, F_g)
    wx_cm = (params["wx"].T * sx).astype(jnp.float32)          # (F_int, F_l)
    wpsi_cm = (params["wpsi"] * params["spsi"][0, 0]).astype(jnp.float32)  # (F_int, 1)
    b_comb = (params["bg"] + params["bx"]).reshape(F_int, 1).astype(jnp.float32)
    bpsi = params["bpsi"].reshape(1, 1).astype(jnp.float32)
    return wg_cm, wx_cm, wpsi_cm, b_comb, bpsi


def _fused_attention_gate_cm(g3, x3, params, *, lane_cap=4096):
    """g3: (N, F_g, HW), x3: (N, F_l, HW)  ->  (N, F_l, HW)."""
    N, F_g, HW = g3.shape
    _, F_l, _ = x3.shape
    wg_cm, wx_cm, wpsi_cm, b_comb, bpsi = _fold_params(params)
    F_int = wg_cm.shape[0]

    thw = _pick_lane_tile(HW, lane_cap)
    grid = (N, HW // thw)

    def act_spec(C):
        return pl.BlockSpec((1, C, thw), lambda n, m: (n, 0, m))

    def full(shape):
        return pl.BlockSpec(shape, lambda n, m: (0, 0))

    return pl.pallas_call(
        _attention_gate_kernel,
        out_shape=jax.ShapeDtypeStruct((N, F_l, HW), x3.dtype),
        grid_spec=pltpu.PrefetchScalarGridSpec(
            num_scalar_prefetch=0,
            grid=grid,
            in_specs=[
                act_spec(F_g),            # g
                act_spec(F_l),            # x
                full((F_int, F_g)),       # wg (folded)
                full((F_int, F_l)),       # wx (folded)
                full((F_int, 1)),         # wpsi (folded)
                full((F_int, 1)),         # combined branch bias
                full((1, 1)),             # psi bias
            ],
            out_specs=act_spec(F_l),
        ),
        compiler_params=pltpu.CompilerParams(
            dimension_semantics=("parallel", "parallel")),
    )(g3, x3, wg_cm, wx_cm, wpsi_cm, b_comb, bpsi)


# ------------------------------- wrapper ----------------------------------- #
def attention_gate(g, x, params):
    """g: (N, F_g, Hg, Wg), x: (N, F_l, H, W) in NCHW like the PyTorch module."""
    N, F_l, H, W = x.shape
    F_g = g.shape[1]
    if g.shape[2:] != (H, W):
        # bilinear, align_corners=False (half-pixel) -> jax.image.resize
        # TODO(synk): resize runs as a plain XLA op outside the Pallas kernel.
        g = jax.image.resize(g, (g.shape[0], F_g, H, W), method="bilinear")
    # NCHW -> (N, C, H*W): pure reshape, no data movement, no padding.
    g3 = g.reshape(N, F_g, H * W)
    x3 = x.reshape(N, F_l, H * W)
    out3 = _fused_attention_gate_cm(g3, x3, params)
    return out3.reshape(N, F_l, H, W)


# ---------------------- deterministic parameter setup ----------------------- #
def make_params(key, F_g, F_l, F_int, eps=1e-5, dtype=jnp.float32):
    """Conv 1x1 weights/biases + eval-mode BatchNorm folded into scale/bias."""
    ks = jax.random.split(key, 9)

    def conv_w(k, cin, cout):
        # (C_out, C_in, 1, 1) in PyTorch -> stored as (C_in, C_out) matmul weight
        return jax.random.normal(k, (cin, cout), dtype) * 0.1

    def bn(k, c):
        gamma = 1.0 + 0.1 * jax.random.normal(k, (c,), dtype)
        beta = 0.05 * jnp.arange(c, dtype=dtype)
        mean = 0.02 * jnp.arange(c, dtype=dtype)
        var = 1.0 + 0.1 * jnp.abs(jnp.sin(jnp.arange(c, dtype=dtype)))
        return gamma, beta, mean, var

    def fold(conv_b, gamma, beta, mean, var):
        scale = gamma / jnp.sqrt(var + eps)
        bias = (conv_b - mean) * scale + beta
        return scale, bias

    wg = conv_w(ks[0], F_g, F_int)
    bg_conv = 0.01 * jnp.arange(F_int, dtype=dtype)
    wx = conv_w(ks[1], F_l, F_int)
    bx_conv = -0.01 * jnp.arange(F_int, dtype=dtype)
    wpsi = conv_w(ks[2], F_int, 1)
    bpsi_conv = jnp.array([0.03], dtype)

    sg, bg = fold(bg_conv, *bn(ks[3], F_int))
    sx, bx = fold(bx_conv, *bn(ks[4], F_int))
    spsi, bpsi = fold(bpsi_conv, *bn(ks[5], 1))

    return {
        "wg": wg, "wx": wx, "wpsi": wpsi,
        "sg": sg.reshape(1, F_int), "bg": bg.reshape(1, F_int),
        "sx": sx.reshape(1, F_int), "bx": bx.reshape(1, F_int),
        "spsi": spsi.reshape(1, 1), "bpsi": bpsi.reshape(1, 1),
    }


# ------------------------------ reference ---------------------------------- #
def attention_gate_ref(g, x, params):
    if g.shape[2:] != x.shape[2:]:
        g = jax.image.resize(g, (g.shape[0], g.shape[1]) + x.shape[2:], "bilinear")
    gf = jnp.transpose(g, (0, 2, 3, 1)).astype(jnp.float32)
    xf = jnp.transpose(x, (0, 2, 3, 1)).astype(jnp.float32)
    g1 = gf @ params["wg"] * params["sg"][0] + params["bg"][0]
    x1 = xf @ params["wx"] * params["sx"][0] + params["bx"][0]
    r = jnp.maximum(g1 + x1, 0.0)
    p = jax.nn.sigmoid(r @ params["wpsi"] * params["spsi"][0, 0] + params["bpsi"][0, 0])
    out = xf * p
    return jnp.transpose(out, (0, 3, 1, 2)).astype(x.dtype)


# --------------------------------- main ------------------------------------- #
if __name__ == "__main__":
    key = jax.random.PRNGKey(0)
    k_g, k_x, k_p = jax.random.split(key, 3)

    N, F_g, F_l, F_int, H, W = 2, 4, 4, 32, 16, 16
    g = jax.random.normal(k_g, (N, F_g, H, W), jnp.float32)
    x = jax.random.normal(k_x, (N, F_l, H, W), jnp.float32)
    params = make_params(k_p, F_g, F_l, F_int)

    out = jax.block_until_ready(attention_gate(g, x, params))
    ref = attention_gate_ref(g, x, params)

    assert out.shape == x.shape, (out.shape, x.shape)
    assert jnp.allclose(out, ref, atol=1e-5, rtol=1e-5), float(jnp.max(jnp.abs(out - ref)))
    print("KERNEL_OK")
</pallas_src>

<mosaic_0001>
module attributes {stable_mosaic.version = 11 : i64} {
  func.func @_attention_gate_kernel(%arg0: i32, %arg1: i32, %arg2: memref<1x4x256xf32, #tpu.memory_space<vmem>>, %arg3: memref<1x4x256xf32, #tpu.memory_space<vmem>>, %arg4: memref<32x4xf32, #tpu.memory_space<vmem>>, %arg5: memref<32x4xf32, #tpu.memory_space<vmem>>, %arg6: memref<32x1xf32, #tpu.memory_space<vmem>>, %arg7: memref<32x1xf32, #tpu.memory_space<vmem>>, %arg8: memref<1x1xf32, #tpu.memory_space<vmem>>, %arg9: memref<1x4x256xf32, #tpu.memory_space<vmem>>) attributes {dimension_semantics = [#tpu.dimension_semantics<parallel>, #tpu.dimension_semantics<parallel>], iteration_bounds = array<i64: 2, 1>, scalar_prefetch = 0 : i64, scratch_operands = 0 : i64, tpu.core_type = #tpu.core_type<tc>, window_params = [{transform_indices = @transform_0, window_bounds = array<i64: 1, 4, 256>}, {transform_indices = @transform_1, window_bounds = array<i64: 1, 4, 256>}, {pipeline_mode = #tpu.pipeline_mode<synchronous>, transform_indices = @transform_2, window_bounds = array<i64: 32, 4>}, {pipeline_mode = #tpu.pipeline_mode<synchronous>, transform_indices = @transform_3, window_bounds = array<i64: 32, 4>}, {pipeline_mode = #tpu.pipeline_mode<synchronous>, transform_indices = @transform_4, window_bounds = array<i64: 32, 1>}, {pipeline_mode = #tpu.pipeline_mode<synchronous>, transform_indices = @transform_5, window_bounds = array<i64: 32, 1>}, {pipeline_mode = #tpu.pipeline_mode<synchronous>, transform_indices = @transform_6, window_bounds = array<i64: 1, 1>}, {transform_indices = @transform_7, window_bounds = array<i64: 1, 4, 256>}]} {
    %c0 = arith.constant 0 : index
    %c0_0 = arith.constant 0 : index
    %c0_1 = arith.constant 0 : index
    %0 = vector.load %arg2[%c0, %c0_0, %c0_1] : memref<1x4x256xf32, #tpu.memory_space<vmem>>, vector<1x4x256xf32>
    %1 = vector.shape_cast %0 : vector<1x4x256xf32> to vector<4x256xf32>
    %c0_2 = arith.constant 0 : index
    %c0_3 = arith.constant 0 : index
    %c0_4 = arith.constant 0 : index
    %2 = vector.load %arg3[%c0_2, %c0_3, %c0_4] : memref<1x4x256xf32, #tpu.memory_space<vmem>>, vector<1x4x256xf32>
    %3 = vector.shape_cast %2 : vector<1x4x256xf32> to vector<4x256xf32>
    %c0_5 = arith.constant 0 : index
    %c0_6 = arith.constant 0 : index
    %4 = vector.load %arg4[%c0_5, %c0_6] : memref<32x4xf32, #tpu.memory_space<vmem>>, vector<32x4xf32>
    %cst = arith.constant dense<0.000000e+00> : vector<32x256xf32>
    %5 = tpu.matmul %4, %1, %cst {dimension_numbers = #tpu.dot_dimension_numbers<[1], [0], [0], [1], [0, 0, 1, 1], [], []>} : vector<32x4xf32>, vector<4x256xf32>, vector<32x256xf32> -> vector<32x256xf32>
    %c0_7 = arith.constant 0 : index
    %c0_8 = arith.constant 0 : index
    %6 = vector.load %arg5[%c0_7, %c0_8] : memref<32x4xf32, #tpu.memory_space<vmem>>, vector<32x4xf32>
    %cst_9 = arith.constant dense<0.000000e+00> : vector<32x256xf32>
    %7 = tpu.matmul %6, %3, %cst_9 {dimension_numbers = #tpu.dot_dimension_numbers<[1], [0], [0], [1], [0, 0, 1, 1], [], []>} : vector<32x4xf32>, vector<4x256xf32>, vector<32x256xf32> -> vector<32x256xf32>
    %8 = arith.addf %5, %7 : vector<32x256xf32>
    %c0_10 = arith.constant 0 : index
    %c0_11 = arith.constant 0 : index
    %9 = vector.load %arg7[%c0_10, %c0_11] : memref<32x1xf32, #tpu.memory_space<vmem>>, vector<32x1xf32>
    %10 = vector.broadcast %9 : vector<32x1xf32> to vector<32x256xf32>
    %11 = arith.addf %8, %10 : vector<32x256xf32>
    %cst_12 = arith.constant 0.000000e+00 : f32
    %12 = vector.broadcast %cst_12 : f32 to vector<32x256xf32>
    %13 = arith.maximumf %11, %12 : vector<32x256xf32>
    %c0_13 = arith.constant 0 : index
    %c0_14 = arith.constant 0 : index
    %14 = vector.load %arg6[%c0_13, %c0_14] : memref<32x1xf32, #tpu.memory_space<vmem>>, vector<32x1xf32>
    %15 = vector.broadcast %14 : vector<32x1xf32> to vector<32x256xf32>
    %16 = arith.mulf %13, %15 : vector<32x256xf32>
    %cst_15 = arith.constant dense<0.000000e+00> : vector<256xf32>
    %17 = vector.multi_reduction <add>, %16, %cst_15 [0] : vector<32x256xf32> to vector<256xf32>
    %18 = vector.shape_cast %17 : vector<256xf32> to vector<1x256xf32>
    %c0_16 = arith.constant 0 : index
    %c0_17 = arith.constant 0 : index
    %19 = vector.load %arg8[%c0_16, %c0_17] : memref<1x1xf32, #tpu.memory_space<vmem>>, vector<1x1xf32>
    %20 = vector.extract %19[0, 0] : f32 from vector<1x1xf32>
    %21 = vector.broadcast %20 : f32 to vector<1x256xf32>
    %22 = arith.addf %18, %21 : vector<1x256xf32>
    %23 = arith.negf %22 : vector<1x256xf32>
    %24 = math.exp %23 : vector<1x256xf32>
    %cst_18 = arith.constant 1.000000e+00 : f32
    %25 = vector.broadcast %cst_18 : f32 to vector<1x256xf32>
    %26 = arith.addf %25, %24 : vector<1x256xf32>
    %27 = arith.divf %25, %26 : vector<1x256xf32>
    %28 = vector.broadcast %27 : vector<1x256xf32> to vector<4x256xf32>
    %29 = arith.mulf %3, %28 : vector<4x256xf32>
    %c0_19 = arith.constant 0 : index
    %c0_20 = arith.constant 0 : index
    %c0_21 = arith.constant 0 : index
    %30 = vector.load %arg9[%c0_19, %c0_20, %c0_21] : memref<1x4x256xf32, #tpu.memory_space<vmem>>, vector<1x4x256xf32>
    %31 = vector.shape_cast %30 : vector<1x4x256xf32> to vector<4x256xf32>
    %32 = vector.shape_cast %29 : vector<4x256xf32> to vector<1x4x256xf32>
    tpu.vector_store %arg9[%c0_19, %c0_20, %c0_21], %32 {strides = array<i32>} : memref<1x4x256xf32, #tpu.memory_space<vmem>>, vector<1x4x256xf32>,
    return
  }
  func.func @transform_0(%arg0: i32, %arg1: i32) -> (i32, i32, i32) {
    %c0_i32 = arith.constant 0 : i32
    %c0_i32_0 = arith.constant 0 : i32
    return %arg0, %c0_i32, %arg1 : i32, i32, i32
  }
  func.func @transform_1(%arg0: i32, %arg1: i32) -> (i32, i32, i32) {
    %c0_i32 = arith.constant 0 : i32
    %c0_i32_0 = arith.constant 0 : i32
    return %arg0, %c0_i32, %arg1 : i32, i32, i32
  }
  func.func @transform_2(%arg0: i32, %arg1: i32) -> (i32, i32) {
    %c0_i32 = arith.constant 0 : i32
    %c0_i32_0 = arith.constant 0 : i32
    %c0_i32_1 = arith.constant 0 : i32
    return %c0_i32, %c0_i32_0 : i32, i32
  }
  func.func @transform_3(%arg0: i32, %arg1: i32) -> (i32, i32) {
    %c0_i32 = arith.constant 0 : i32
    %c0_i32_0 = arith.constant 0 : i32
    %c0_i32_1 = arith.constant 0 : i32
    return %c0_i32, %c0_i32_0 : i32, i32
  }
  func.func @transform_4(%arg0: i32, %arg1: i32) -> (i32, i32) {
    %c0_i32 = arith.constant 0 : i32
    %c0_i32_0 = arith.constant 0 : i32
    %c0_i32_1 = arith.constant 0 : i32
    return %c0_i32, %c0_i32_0 : i32, i32
  }
  func.func @transform_5(%arg0: i32, %arg1: i32) -> (i32, i32) {
    %c0_i32 = arith.constant 0 : i32
    %c0_i32_0 = arith.constant 0 : i32
    %c0_i32_1 = arith.constant 0 : i32
    return %c0_i32, %c0_i32_0 : i32, i32
  }
  func.func @transform_6(%arg0: i32, %arg1: i32) -> (i32, i32) {
    %c0_i32 = arith.constant 0 : i32
    %c0_i32_0 = arith.constant 0 : i32
    %c0_i32_1 = arith.constant 0 : i32
    return %c0_i32, %c0_i32_0 : i32, i32
  }
  func.func @transform_7(%arg0: i32, %arg1: i32) -> (i32, i32, i32) {
    %c0_i32 = arith.constant 0 : i32
    %c0_i32_0 = arith.constant 0 : i32
    return %arg0, %c0_i32, %arg1 : i32, i32, i32
  }
}

</mosaic_0001>

<llo_original>
// kernel: tpu_custom_call.1
$region0: #{tpu_custom_call.1}
  #allocation0 [shape = 'u32[]', space=smem, size = 0x4, offset = 0x4, fixed_abs, tag = 'smem constant byte address 0x4 - core index']
  #allocation1 [shape = 'u32[144,128]{1,0:T(1,128)}', space=vmem, size = 0x12000, scoped, tag = 'internal scratch']
  #allocation2 [shape = 'f32[1,1]{1,0:T(1,128)S(1)}', space=vmem, size = 0x200, scoped, tag = 'scoped memory for tpu_custom_call.1']
  %s0 = inlined_call_operand.vmem [shape: f32[2,4,256], index: 0, kind: input, shape index: {}]
  %s1 = inlined_call_operand.vmem [shape: f32[2,4,256], index: 1, kind: input, shape index: {}]
  %s2 = inlined_call_operand.vmem [shape: f32[32,4], index: 2, kind: input, shape index: {}]
  %s3 = inlined_call_operand.vmem [shape: f32[32,4], index: 3, kind: input, shape index: {}]
  %s4 = inlined_call_operand.vmem [shape: f32[32,1], index: 4, kind: input, shape index: {}]
  %s5 = inlined_call_operand.vmem [shape: f32[32,1], index: 5, kind: input, shape index: {}]
  %s6 = inlined_call_operand.<no memory space> [shape: f32[1,1], index: 6, kind: input, shape index: {}]
  %s7 = inlined_call_operand.hbm [shape: f32[2,4,256], index: 7, kind: output, shape index: {}]
  %s8 = sld [smem:[#allocation0]]
  $region61: #{tpu_custom_call.1} parent=0
    _
  %s10 = ssub.s32 1, %s8
  %s11 = scalar_select 0, %s10, %s8
  %v12 = vstv %s6
  %13 = vst [vmem:[#allocation2] sm:$0x1] %v12
  $region1: #{tpu_custom_call.1} parent=0
    #allocation3 [shape = 'u8[8192]{0}', space=vmem, size = 0x2000, scoped, tag = 'output window, operand 0']
    #allocation4 [shape = 's32[2]{0}', space=sflag, size = 0x8, scoped, tag = 'scoped memory for tpu_custom_call.1']
    %14 = vsyncpa [#allocation4], 0
    %s15 = scalar_lea.sflag [#allocation4], 1
    %16 = vsyncpa %s15, 0
    loop: start=0, step=1, limit=4
    $region2: #{tpu_custom_call.1} parent=1 // loop_pre_header
      _
    $region3: #{tpu_custom_call.1} parent=1 // loop_header
      %s18 = sphi 0, %s22
      %p19 = scmp.ge.s32.totalorder %s18, 4
      %s25 = sphi 0, %s37
      %s26 = sphi 0, %s33
      %s27 = sphi 0, %s25
      %s28 = sphi 0, %s26
      %s29 = sphi 0, %s27
      %s30 = sphi 0, %s28
      %s42 = sphi 0, %s44
      %s45 = sphi 0, %s42
      %s46 = sphi 0, %s45
      %s62 = sphi 0, %s46
      %s70 = sphi 0, %s72
      %s73 = sphi 0, %s70
      %s74 = sphi 0, %s73
      %s90 = sphi 0, %s74
      %s94 = sphi 0, %s94
      %s96 = sphi 0, %s94
      %s97 = sphi 0, %s96
      %s111 = sphi 0, %s97
      %s115 = sphi 0, %s115
      %s117 = sphi 0, %s115
      %s118 = sphi 0, %s117
      %s132 = sphi 0, %s118
      %s136 = sphi 0, %s136
      %s138 = sphi 0, %s136
      %s139 = sphi 0, %s138
      %s153 = sphi 0, %s139
      %s157 = sphi 0, %s157
      %s159 = sphi 0, %s157
      %s160 = sphi 0, %s159
      %s174 = sphi 0, %s160
      %s178 = sphi 0, %s178
      %s180 = sphi 0, %s178
      %s181 = sphi 0, %s180
      %s195 = sphi 0, %s181
      %s203 = sphi 0, %s205
      %s206 = sphi 0, %s203
      %s207 = sphi 0, %s206
      %s223 = sphi 0, %s207
    $region4: #{tpu_custom_call.1} parent=1 // loop_header_branch
      %21 = sbr.rel (%p19) target = $region8
    $region5: #{tpu_custom_call.1} parent=1 // loop_body
      %s23 = ssub.s32 %s18, 1
      %s24 = ssub.s32 %s18, 2
      %s31 = sadd.s32 1, %s26
      %p32 = scmp.ge.s32.totalorder %s31, 1
      %s33 = scalar_select %p32, 0, %s31
      %s34 = sadd.s32 1, %s25
      %s35 = scalar_select %p32, %s34, %s25
      %p36 = scmp.ge.s32.totalorder %s35, 2
      %s37 = scalar_select %p36, 0, %s35
      %s38 = ssub.s32 %s25, %s37
      %s39 = ssub.s32 %s26, %s33
      %s40 = sor.u32 %s38, %s39
      %p41 = scmp.eq.s32.totalorder %s40, 0
      %s43 = sadd.s32 %s42, 1
      %s44 = scalar_select %p41, %s42, %s43
      %p47 = pneg %p41
      %p48 = scmp.eq.s32.totalorder %s18, 1
      %p49 = por %p47, %p48
      %p50 = scmp.ne.s32.totalorder %s42, %s45
      %p51 = scmp.eq.s32.totalorder %s18, 0
      %p52 = por %p50, %p51
      %p53 = scmp.ne.s32.totalorder %s42, %s45
      %p54 = scmp.eq.s32.totalorder %s23, 1
      %p55 = por %p53, %p54
      %p56 = scmp.ne.s32.totalorder %s45, %s46
      %p57 = scmp.eq.s32.totalorder %s23, 0
      %p58 = por %p56, %p57
      %p59 = scmp.ne.s32.totalorder %s45, %s46
      %p60 = scmp.eq.s32.totalorder %s24, 1
      %p61 = por %p59, %p60
      %p63 = scmp.ne.s32.totalorder %s46, %s62
      %p64 = scmp.eq.s32.totalorder %s24, 0
      %p65 = por %p63, %p64
      %s66 = ssub.s32 %s25, %s37
      %s67 = ssub.s32 %s26, %s33
      %s68 = sor.u32 %s66, %s67
      %p69 = scmp.eq.s32.totalorder %s68, 0
      %s71 = sadd.s32 %s70, 1
      %s72 = scalar_select %p69, %s70, %s71
      %p75 = pneg %p69
      %p76 = scmp.eq.s32.totalorder %s18, 1
      %p77 = por %p75, %p76
      %p78 = scmp.ne.s32.totalorder %s70, %s73
      %p79 = scmp.eq.s32.totalorder %s18, 0
      %p80 = por %p78, %p79
      %p81 = scmp.ne.s32.totalorder %s70, %s73
      %p82 = scmp.eq.s32.totalorder %s23, 1
      %p83 = por %p81, %p82
      %p84 = scmp.ne.s32.totalorder %s73, %s74
      %p85 = scmp.eq.s32.totalorder %s23, 0
      %p86 = por %p84, %p85
      %p87 = scmp.ne.s32.totalorder %s73, %s74
      %p88 = scmp.eq.s32.totalorder %s24, 1
      %p89 = por %p87, %p88
      %p91 = scmp.ne.s32.totalorder %s74, %s90
      %p92 = scmp.eq.s32.totalorder %s24, 0
      %p93 = por %p91, %p92
      %s95 = sadd.s32 %s94, 1
      %p98 = scmp.eq.s32.totalorder %s18, 1
      %p99 = scmp.ne.s32.totalorder %s94, %s96
      %p100 = scmp.eq.s32.totalorder %s18, 0
      %p101 = por %p99, %p100
      %p102 = scmp.ne.s32.totalorder %s94, %s96
      %p103 = scmp.eq.s32.totalorder %s23, 1
      %p104 = por %p102, %p103
      %p105 = scmp.ne.s32.totalorder %s96, %s97
      %p106 = scmp.eq.s32.totalorder %s23, 0
      %p107 = por %p105, %p106
      %p108 = scmp.ne.s32.totalorder %s96, %s97
      %p109 = scmp.eq.s32.totalorder %s24, 1
      %p110 = por %p108, %p109
      %p112 = scmp.ne.s32.totalorder %s97, %s111
      %p113 = scmp.eq.s32.totalorder %s24, 0
      %p114 = por %p112, %p113
      %s116 = sadd.s32 %s115, 1
      %p119 = scmp.eq.s32.totalorder %s18, 1
      %p120 = scmp.ne.s32.totalorder %s115, %s117
      %p121 = scmp.eq.s32.totalorder %s18, 0
      %p122 = por %p120, %p121
      %p123 = scmp.ne.s32.totalorder %s115, %s117
      %p124 = scmp.eq.s32.totalorder %s23, 1
      %p125 = por %p123, %p124
      %p126 = scmp.ne.s32.totalorder %s117, %s118
      %p127 = scmp.eq.s32.totalorder %s23, 0
      %p128 = por %p126, %p127
      %p129 = scmp.ne.s32.totalorder %s117, %s118
      %p130 = scmp.eq.s32.totalorder %s24, 1
      %p131 = por %p129, %p130
      %p133 = scmp.ne.s32.totalorder %s118, %s132
      %p134 = scmp.eq.s32.totalorder %s24, 0
      %p135 = por %p133, %p134
      %s137 = sadd.s32 %s136, 1
      %p140 = scmp.eq.s32.totalorder %s18, 1
      %p141 = scmp.ne.s32.totalorder %s136, %s138
      %p142 = scmp.eq.s32.totalorder %s18, 0
      %p143 = por %p141, %p142
      %p144 = scmp.ne.s32.totalorder %s136, %s138
      %p145 = scmp.eq.s32.totalorder %s23, 1
      %p146 = por %p144, %p145
      %p147 = scmp.ne.s32.totalorder %s138, %s139
      %p148 = scmp.eq.s32.totalorder %s23, 0
      %p149 = por %p147, %p148
      %p150 = scmp.ne.s32.totalorder %s138, %s139
      %p151 = scmp.eq.s32.totalorder %s24, 1
      %p152 = por %p150, %p151
      %p154 = scmp.ne.s32.totalorder %s139, %s153
      %p155 = scmp.eq.s32.totalorder %s24, 0
      %p156 = por %p154, %p155
      %s158 = sadd.s32 %s157, 1
      %p161 = scmp.eq.s32.totalorder %s18, 1
      %p162 = scmp.ne.s32.totalorder %s157, %s159
      %p163 = scmp.eq.s32.totalorder %s18, 0
      %p164 = por %p162, %p163
      %p165 = scmp.ne.s32.totalorder %s157, %s159
      %p166 = scmp.eq.s32.totalorder %s23, 1
      %p167 = por %p165, %p166
      %p168 = scmp.ne.s32.totalorder %s159, %s160
      %p169 = scmp.eq.s32.totalorder %s23, 0
      %p170 = por %p168, %p169
      %p171 = scmp.ne.s32.totalorder %s159, %s160
      %p172 = scmp.eq.s32.totalorder %s24, 1
      %p173 = por %p171, %p172
      %p175 = scmp.ne.s32.totalorder %s160, %s174
      %p176 = scmp.eq.s32.totalorder %s24, 0
      %p177 = por %p175, %p176
      %s179 = sadd.s32 %s178, 1
      %p182 = scmp.eq.s32.totalorder %s18, 1
      %p183 = scmp.ne.s32.totalorder %s178, %s180
      %p184 = scmp.eq.s32.totalorder %s18, 0
      %p185 = por %p183, %p184
      %p186 = scmp.ne.s32.totalorder %s178, %s180
      %p187 = scmp.eq.s32.totalorder %s23, 1
      %p188 = por %p186, %p187
      %p189 = scmp.ne.s32.totalorder %s180, %s181
      %p190 = scmp.eq.s32.totalorder %s23, 0
      %p191 = por %p189, %p190
      %p192 = scmp.ne.s32.totalorder %s180, %s181
      %p193 = scmp.eq.s32.totalorder %s24, 1
      %p194 = por %p192, %p193
      %p196 = scmp.ne.s32.totalorder %s181, %s195
      %p197 = scmp.eq.s32.totalorder %s24, 0
      %p198 = por %p196, %p197
      %s199 = ssub.s32 %s25, %s37
      %s200 = ssub.s32 %s26, %s33
      %s201 = sor.u32 %s199, %s200
      %p202 = scmp.eq.s32.totalorder %s201, 0
      %s204 = sadd.s32 %s203, 1
      %s205 = scalar_select %p202, %s203, %s204
      %p208 = pneg %p202
      %p209 = scmp.eq.s32.totalorder %s18, 1
      %p210 = por %p208, %p209
      %p211 = scmp.ne.s32.totalorder %s203, %s206
      %p212 = scmp.eq.s32.totalorder %s18, 0
      %p213 = por %p211, %p212
      %p214 = scmp.ne.s32.totalorder %s203, %s206
      %p215 = scmp.eq.s32.totalorder %s23, 1
      %p216 = por %p214, %p215
      %p217 = scmp.ne.s32.totalorder %s206, %s207
      %p218 = scmp.eq.s32.totalorder %s23, 0
      %p219 = por %p217, %p218
      %p220 = scmp.ne.s32.totalorder %s206, %s207
      %p221 = scmp.eq.s32.totalorder %s24, 1
      %p222 = por %p220, %p221
      %p224 = scmp.ne.s32.totalorder %s207, %s223
      %p225 = scmp.eq.s32.totalorder %s24, 0
      %p226 = por %p224, %p225
      %p227 = scmp.le.s32.totalorder 1, %s18
      %p228 = scmp.lt.s32.totalorder %s18, 3
      %p229 = pnand %p227, %p228
      %p230 = pneg %p229
      // Predicated region
      $region9: #{tpu_custom_call.1} parent=5 // pred_check
        _
      $region10: #{tpu_custom_call.1} parent=5 // pred_check_branch
        %232 = sbr.rel (%p229) target = $region12
      $region11: #{tpu_custom_call.1} parent=5 // pred_region
        %s233 = ssub.s32 %s18, 1
        // Predicated region
        $region13: #{tpu_custom_call.1} parent=11 // pred_check
          %p234 = pneg %p107
        $region14: #{tpu_custom_call.1} parent=11 // pred_check_branch
          %236 = sbr.rel (%p234) target = $region16
        $region15: #{tpu_custom_call.1} parent=11 // pred_region
          _
        $region16: #{tpu_custom_call.1} parent=11 // pred_fallthru
          _
        // Predicated region
        $region17: #{tpu_custom_call.1} parent=11 // pred_check
          %p237 = pneg %p128
        $region18: #{tpu_custom_call.1} parent=11 // pred_check_branch
          %239 = sbr.rel (%p237) target = $region20
        $region19: #{tpu_custom_call.1} parent=11 // pred_region
          _
        $region20: #{tpu_custom_call.1} parent=11 // pred_fallthru
          _
        // Predicated region
        $region21: #{tpu_custom_call.1} parent=11 // pred_check
          %p240 = pneg %p149
        $region22: #{tpu_custom_call.1} parent=11 // pred_check_branch
          %242 = sbr.rel (%p240) target = $region24
        $region23: #{tpu_custom_call.1} parent=11 // pred_region
          _
        $region24: #{tpu_custom_call.1} parent=11 // pred_fallthru
          _
        // Predicated region
        $region25: #{tpu_custom_call.1} parent=11 // pred_check
          %p243 = pneg %p170
        $region26: #{tpu_custom_call.1} parent=11 // pred_check_branch
          %245 = sbr.rel (%p243) target = $region28
        $region27: #{tpu_custom_call.1} parent=11 // pred_region
          _
        $region28: #{tpu_custom_call.1} parent=11 // pred_fallthru
          _
        // Predicated region
        $region29: #{tpu_custom_call.1} parent=11 // pred_check
          %p246 = pneg %p191
        $region30: #{tpu_custom_call.1} parent=11 // pred_check_branch
          %248 = sbr.rel (%p246) target = $region32
        $region31: #{tpu_custom_call.1} parent=11 // pred_region
          _
        $region32: #{tpu_custom_call.1} parent=11 // pred_fallthru
          _
      $region12: #{tpu_custom_call.1} parent=5 // pred_fallthru
        _
      %p249 = scmp.lt.s32.totalorder %s18, 2
      // Predicated region
      $region33: #{tpu_custom_call.1} parent=5 // pred_check
        %p250 = pneg %p249
      $region34: #{tpu_custom_call.1} parent=5 // pred_check_branch
        %252 = sbr.rel (%p250) target = $region36
      $region35: #{tpu_custom_call.1} parent=5 // pred_region
        // Predicated region
        $region37: #{tpu_custom_call.1} parent=35 // pred_check
          %p253 = pneg %p52
        $region38: #{tpu_custom_call.1} parent=35 // pred_check_branch
          %255 = sbr.rel (%p253) target = $region40
        $region39: #{tpu_custom_call.1} parent=35 // pred_region
          %s256 = smul.u32 2, %s26
          %p257 = scmp.lt.s32.totalorder %s25, 1
          %s258 = scalar_select %p257, %s25, 1
          %p259 = scmp.lt.s32.totalorder %s256, 1
          %s260 = scalar_select %p259, %s256, 1
          %s261 = smul.addr %s258, 2
          %s262 = sadd.s32 %s260, %s261
          %s263 = smul.addr %s262, 4
          %s264 = scalar_lea.vmem %s0, %s263
          %s265 = smul.u32 2, %s26
        $region40: #{tpu_custom_call.1} parent=35 // pred_fallthru
          _
        // Predicated region
        $region41: #{tpu_custom_call.1} parent=35 // pred_check
          %p266 = pneg %p80
        $region42: #{tpu_custom_call.1} parent=35 // pred_check_branch
          %268 = sbr.rel (%p266) target = $region44
        $region43: #{tpu_custom_call.1} parent=35 // pred_region
          %s269 = smul.u32 2, %s26
          %p270 = scmp.lt.s32.totalorder %s25, 1
          %s271 = scalar_select %p270, %s25, 1
          %p272 = scmp.lt.s32.totalorder %s269, 1
          %s273 = scalar_select %p272, %s269, 1
          %s274 = smul.addr %s271, 2
          %s275 = sadd.s32 %s273, %s274
          %s276 = smul.addr %s275, 4
          %s277 = scalar_lea.vmem %s1, %s276
          %s278 = smul.u32 2, %s26
        $region44: #{tpu_custom_call.1} parent=35 // pred_fallthru
          _
      $region36: #{tpu_custom_call.1} parent=5 // pred_fallthru
        _
      %p279 = scmp.le.s32.totalorder 1, %s18
      %p280 = scmp.lt.s32.totalorder %s18, 3
      %p281 = pnand %p279, %p280
      %p282 = pneg %p281
      // Predicated region
      $region45: #{tpu_custom_call.1} parent=5 // pred_check
        _
      $region46: #{tpu_custom_call.1} parent=5 // pred_check_branch
        %284 = sbr.rel (%p281) target = $region48
      $region47: #{tpu_custom_call.1} parent=5 // pred_region
        %s285 = ssub.s32 %s18, 1
        %s286 = smul.u32 2, %s28
        %p287 = scmp.lt.s32.totalorder %s27, 1
        %s288 = scalar_select %p287, %s27, 1
        %p289 = scmp.lt.s32.totalorder %s286, 1
        %s290 = scalar_select %p289, %s286, 1
        %s291 = smul.addr %s288, 2
        %s292 = sadd.s32 %s290, %s291
        %s293 = smul.addr %s292, 4
        %s294 = scalar_lea.vmem %s0, %s293
        %p295 = pneg %p58
        %p296 = pneg %p55
        %s297 = smul.u32 2, %s28
        %p298 = scmp.lt.s32.totalorder %s27, 1
        %s299 = scalar_select %p298, %s27, 1
        %p300 = scmp.lt.s32.totalorder %s297, 1
        %s301 = scalar_select %p300, %s297, 1
        %s302 = smul.addr %s299, 2
        %s303 = sadd.s32 %s301, %s302
        %s304 = smul.addr %s303, 4
        %s305 = scalar_lea.vmem %s1, %s304
        %p306 = pneg %p86
        %p307 = pneg %p83
        %p308 = pneg %p107
        %p309 = pneg %p104
        %p310 = pneg %p128
        %p311 = pneg %p125
        %p312 = pneg %p149
        %p313 = pneg %p146
        %p314 = pneg %p170
        %p315 = pneg %p167
        %p316 = pneg %p191
        %p317 = pneg %p188
        %p318 = pneg %p219
        %p319 = pneg %p216
        %s320 = sand.u32 %s206, 1
        %s321 = scalar_lea.sflag [#allocation4], %s320
        %s322 = sand.u32 %s206, 1
        %s323 = smul.addr %s322, 8
        %s324 = scalar_lea.vmem [#allocation3], %s323
        %s325 = smul.u32 2, %s28
        %p326 = scmp.lt.s32.totalorder %s27, 1
        %s327 = scalar_select %p326, %s27, 1
        %p328 = scmp.lt.s32.totalorder %s325, 1
        %s329 = scalar_select %p328, %s325, 1
        %s330 = smul.addr %s327, 2
        %s331 = sadd.s32 %s329, %s330
        %s332 = smul.addr %s331, 4
        %s333 = scalar_lea.vmem %s0, %s332
        %s334 = smul.u32 2, %s28
        %s335 = smul.u32 2, %s28
        %p336 = scmp.lt.s32.totalorder %s27, 1
        %s337 = scalar_select %p336, %s27, 1
        %p338 = scmp.lt.s32.totalorder %s335, 1
        %s339 = scalar_select %p338, %s335, 1
        %s340 = smul.addr %s337, 2
        %s341 = sadd.s32 %s339, %s340
        %s342 = smul.addr %s341, 4
        %s343 = scalar_lea.vmem %s1, %s342
        %s344 = smul.u32 2, %s28
        %s345 = smul.u32 2, %s28
        %v346 = vld [vmem:[%s333] sm:$0xff]
        %v347 = vld [vmem:[%s343] sm:$0xff]
        %v348 = vld [vmem:[%s2] sm:$0xff]
        %v349 = vld [vmem:[%s2 + $0x8] sm:$0xff]
        %v350 = vld [vmem:[%s2 + $0x10] sm:$0xff]
        %v351 = vld [vmem:[%s2 + $0x18] sm:$0xff]
        %v352 = vld [vmem:[%s3] sm:$0xff]
        %v353 = vld [vmem:[%s3 + $0x8] sm:$0xff]
        %v354 = vld [vmem:[%s3 + $0x10] sm:$0xff]
        %v355 = vld [vmem:[%s3 + $0x18] sm:$0xff]
        %v357 = vcombine.high %v347, %v347
        %vm358 = vcmask 31744
        %v360 = vsel %vm358, %v352, 0
        %v363 = vsel %vm358, %v353, 0
        %v366 = vsel %vm358, %v354, 0
        %v369 = vsel %vm358, %v355, 0
        %vm371 = vcmask 1043456
        %v372 = vsel %vm371, %v347, 0
        %v374 = vsel %vm371, %v357, 0
        %376 = vmatprep.subr.mxu0 %v374
        %377 = vmatpush1.msra.mxu0 %v372
        %378 = vmatprep.subr.mxu0 0.0
        %379 = vmatpush1.msra.mxu0 0.0
        %380 = vmatprep.subr.mxu0 0.0
        %381 = vmatpush1.msra.mxu0 0.0
        %382 = vmatprep.subr.mxu0 0.0
        %383 = vmatpush1.msra.mxu0 0.0
        %384 = vmatprep.subr.mxu0 0.0
        %385 = vmatpush1.msra.mxu0 0.0
        %386 = vmatprep.subr.mxu0 0.0
        %387 = vmatpush1.msra.mxu0 0.0
        %388 = vmatprep.subr.mxu0 0.0
        %389 = vmatpush1.msra.mxu0 0.0
        %390 = vmatprep.subr.mxu0 0.0
        %391 = vmatpush1.msra.mxu0 0.0
        %392 = vmatprep.subr.mxu0 0.0
        %393 = vmatpush1.msra.mxu0 0.0
        %394 = vmatprep.subr.mxu0 0.0
        %395 = vmatpush1.msra.mxu0 0.0
        %396 = vmatprep.subr.mxu0 0.0
        %397 = vmatpush1.msra.mxu0 0.0
        %398 = vmatprep.subr.mxu0 0.0
        %399 = vmatpush1.msra.mxu0 0.0
        %400 = vmatprep.subr.mxu0 0.0
        %401 = vmatpush1.msra.mxu0 0.0
        %402 = vmatprep.subr.mxu0 0.0
        %403 = vmatpush1.msra.mxu0 0.0
        %404 = vmatprep.subr.mxu0 0.0
        %405 = vmatpush1.msra.mxu0 0.0
        %406 = vmatprep.subr.mxu0 0.0
        %407 = vmatpush1.msra.mxu0 0.0
        %408 = vmatprep.subr.mxu0 0.0
        %409 = vmatpush1.msra.mxu0 0.0
        %410 = vmatprep.subr.mxu0 0.0
        %411 = vmatpush1.msra.mxu0 0.0
        %412 = vmatprep.subr.mxu0 0.0
        %413 = vmatpush1.msra.mxu0 0.0
        %414 = vmatprep.subr.mxu0 0.0
        %415 = vmatpush1.msra.mxu0 0.0
        %416 = vmatprep.subr.mxu0 0.0
        %417 = vmatpush1.msra.mxu0 0.0
        %418 = vmatprep.subr.mxu0 0.0
        %419 = vmatpush1.msra.mxu0 0.0
        %420 = vmatprep.subr.mxu0 0.0
        %421 = vmatpush1.msra.mxu0 0.0
        %422 = vmatprep.subr.mxu0 0.0
        %423 = vmatpush1.msra.mxu0 0.0
        %424 = vmatprep.subr.mxu0 0.0
        %425 = vmatpush1.msra.mxu0 0.0
        %426 = vmatprep.subr.mxu0 0.0
        %427 = vmatpush1.msra.mxu0 0.0
        %428 = vmatprep.subr.mxu0 0.0
        %429 = vmatpush1.msra.mxu0 0.0
        %430 = vmatprep.subr.mxu0 0.0
        %431 = vmatpush1.msra.mxu0 0.0
        %432 = vmatprep.subr.mxu0 0.0
        %433 = vmatpush1.msra.mxu0 0.0
        %434 = vmatprep.subr.mxu0 0.0
        %435 = vmatpush1.msra.mxu0 0.0
        %436 = vmatprep.subr.mxu0 0.0
        %437 = vmatpush1.msra.mxu0 0.0
        %438 = vmatprep.subr.mxu0 0.0
        %439 = vmatpush1.msra.mxu0 0.0
        %440 = vmatprep.mubr.f32.mxu0 0.0
        %441 = vmatmul.mubr.f32.gmra.mrb[0].mxu0 %v360
        %v442 = vpop.f32.mrb[0].mxu0
        %v443 = vadd.f32 0.0, %v442
        %v444 = vpop.f32.mrb[0].mxu0
        %v445 = vadd.f32 0.0, %v444
        %446 = vmatprep.mubr.f32.mxu0 0.0
        %447 = vmatmul.mubr.f32.gmra.mrb[0].mxu0 %v363
        %v448 = vpop.f32.mrb[0].mxu0
        %v449 = vadd.f32 0.0, %v448
        %v450 = vpop.f32.mrb[0].mxu0
        %v451 = vadd.f32 0.0, %v450
        %452 = vmatprep.mubr.f32.mxu0 0.0
        %453 = vmatmul.mubr.f32.gmra.mrb[0].mxu0 %v366
        %v454 = vpop.f32.mrb[0].mxu0
        %v455 = vadd.f32 0.0, %v454
        %v456 = vpop.f32.mrb[0].mxu0
        %v457 = vadd.f32 0.0, %v456
        %458 = vmatprep.mubr.f32.mxu0 0.0
        %459 = vmatmul.mubr.f32.gmra.mrb[0].mxu0 %v369
        %v460 = vpop.f32.mrb[0].mxu0
        %v461 = vadd.f32 0.0, %v460
        %v462 = vpop.f32.mrb[0].mxu0
        %v463 = vadd.f32 0.0, %v462
        %464 = vdwg.mxu0
        %v466 = vcombine.high %v346, %v346
        %v468 = vsel %vm358, %v348, 0
        %v471 = vsel %vm358, %v349, 0
        %v474 = vsel %vm358, %v350, 0
        %v477 = vsel %vm358, %v351, 0
        %v479 = vsel %vm371, %v346, 0
        %v481 = vsel %vm371, %v466, 0
        %483 = vmatprep.subr.mxu0 %v481
        %484 = vmatpush1.msra.mxu0 %v479
        %485 = vmatprep.subr.mxu0 0.0
        %486 = vmatpush1.msra.mxu0 0.0
        %487 = vmatprep.subr.mxu0 0.0
        %488 = vmatpush1.msra.mxu0 0.0
        %489 = vmatprep.subr.mxu0 0.0
        %490 = vmatpush1.msra.mxu0 0.0
        %491 = vmatprep.subr.mxu0 0.0
        %492 = vmatpush1.msra.mxu0 0.0
        %493 = vmatprep.subr.mxu0 0.0
        %494 = vmatpush1.msra.mxu0 0.0
        %495 = vmatprep.subr.mxu0 0.0
        %496 = vmatpush1.msra.mxu0 0.0
        %497 = vmatprep.subr.mxu0 0.0
        %498 = vmatpush1.msra.mxu0 0.0
        %499 = vmatprep.subr.mxu0 0.0
        %500 = vmatpush1.msra.mxu0 0.0
        %501 = vmatprep.subr.mxu0 0.0
        %502 = vmatpush1.msra.mxu0 0.0
        %503 = vmatprep.subr.mxu0 0.0
        %504 = vmatpush1.msra.mxu0 0.0
        %505 = vmatprep.subr.mxu0 0.0
        %506 = vmatpush1.msra.mxu0 0.0
        %507 = vmatprep.subr.mxu0 0.0
        %508 = vmatpush1.msra.mxu0 0.0
        %509 = vmatprep.subr.mxu0 0.0
        %510 = vmatpush1.msra.mxu0 0.0
        %511 = vmatprep.subr.mxu0 0.0
        %512 = vmatpush1.msra.mxu0 0.0
        %513 = vmatprep.subr.mxu0 0.0
        %514 = vmatpush1.msra.mxu0 0.0
        %515 = vmatprep.subr.mxu0 0.0
        %516 = vmatpush1.msra.mxu0 0.0
        %517 = vmatprep.subr.mxu0 0.0
        %518 = vmatpush1.msra.mxu0 0.0
        %519 = vmatprep.subr.mxu0 0.0
        %520 = vmatpush1.msra.mxu0 0.0
        %521 = vmatprep.subr.mxu0 0.0
        %522 = vmatpush1.msra.mxu0 0.0
        %523 = vmatprep.subr.mxu0 0.0
        %524 = vmatpush1.msra.mxu0 0.0
        %525 = vmatprep.subr.mxu0 0.0
        %526 = vmatpush1.msra.mxu0 0.0
        %527 = vmatprep.subr.mxu0 0.0
        %528 = vmatpush1.msra.mxu0 0.0
        %529 = vmatprep.subr.mxu0 0.0
        %530 = vmatpush1.msra.mxu0 0.0
        %531 = vmatprep.subr.mxu0 0.0
        %532 = vmatpush1.msra.mxu0 0.0
        %533 = vmatprep.subr.mxu0 0.0
        %534 = vmatpush1.msra.mxu0 0.0
        %535 = vmatprep.subr.mxu0 0.0
        %536 = vmatpush1.msra.mxu0 0.0
        %537 = vmatprep.subr.mxu0 0.0
        %538 = vmatpush1.msra.mxu0 0.0
        %539 = vmatprep.subr.mxu0 0.0
        %540 = vmatpush1.msra.mxu0 0.0
        %541 = vmatprep.subr.mxu0 0.0
        %542 = vmatpush1.msra.mxu0 0.0
        %543 = vmatprep.subr.mxu0 0.0
        %544 = vmatpush1.msra.mxu0 0.0
        %545 = vmatprep.subr.mxu0 0.0
        %546 = vmatpush1.msra.mxu0 0.0
        %547 = vmatprep.mubr.f32.mxu0 0.0
        %548 = vmatmul.mubr.f32.gmra.mrb[0].mxu0 %v468
        %v549 = vpop.f32.mrb[0].mxu0
        %v550 = vadd.f32 %v443, %v549
        %v551 = vpop.f32.mrb[0].mxu0
        %v552 = vadd.f32 %v445, %v551
        %553 = vmatprep.mubr.f32.mxu0 0.0
        %554 = vmatmul.mubr.f32.gmra.mrb[0].mxu0 %v471
        %v555 = vpop.f32.mrb[0].mxu0
        %v556 = vadd.f32 %v449, %v555
        %v557 = vpop.f32.mrb[0].mxu0
        %v558 = vadd.f32 %v451, %v557
        %559 = vmatprep.mubr.f32.mxu0 0.0
        %560 = vmatmul.mubr.f32.gmra.mrb[0].mxu0 %v474
        %v561 = vpop.f32.mrb[0].mxu0
        %v562 = vadd.f32 %v455, %v561
        %v563 = vpop.f32.mrb[0].mxu0
        %v564 = vadd.f32 %v457, %v563
        %565 = vmatprep.mubr.f32.mxu0 0.0
        %566 = vmatmul.mubr.f32.gmra.mrb[0].mxu0 %v477
        %v567 = vpop.f32.mrb[0].mxu0
        %v568 = vadd.f32 %v461, %v567
        %v569 = vpop.f32.mrb[0].mxu0
        %v570 = vadd.f32 %v463, %v569
        %571 = vdwg.mxu0
        %v572 = vld [vmem:[%s5] sm:$0xff]
        %v573 = vld [vmem:[%s5 + $0x8] sm:$0xff]
        %v574 = vld [vmem:[%s5 + $0x10] sm:$0xff]
        %v575 = vld [vmem:[%s5 + $0x18] sm:$0xff]
        %577 = vset.pattern.permute.xlu0 0
        %578 = vperm.xlu0 %577, %v572
        %v579 = vpop.permute.xlu0 %578
        %582 = vset.pattern.permute.xlu0 0
        %583 = vperm.xlu0 %582, %v573
        %v584 = vpop.permute.xlu0 %583
        %587 = vset.pattern.permute.xlu0 0
        %588 = vperm.xlu0 %587, %v574
        %v589 = vpop.permute.xlu0 %588
        %592 = vset.pattern.permute.xlu0 0
        %593 = vperm.xlu0 %592, %v575
        %v594 = vpop.permute.xlu0 %593
        %v596 = vadd.f32 %v550, %v579
        %v597 = vadd.f32 %v552, %v579
        %v598 = vadd.f32 %v556, %v584
        %v599 = vadd.f32 %v558, %v584
        %v600 = vadd.f32 %v562, %v589
        %v601 = vadd.f32 %v564, %v589
        %v602 = vadd.f32 %v568, %v594
        %v603 = vadd.f32 %v570, %v594
        %v604 = vmax.f32 %v596, 0.0
        %v605 = vmax.f32 %v597, 0.0
        %v606 = vmax.f32 %v598, 0.0
        %v607 = vmax.f32 %v599, 0.0
        %v608 = vmax.f32 %v600, 0.0
        %v609 = vmax.f32 %v601, 0.0
        %v610 = vmax.f32 %v602, 0.0
        %v611 = vmax.f32 %v603, 0.0
        %v612 = vld [vmem:[%s4] sm:$0xff]
        %v613 = vld [vmem:[%s4 + $0x8] sm:$0xff]
        %v614 = vld [vmem:[%s4 + $0x10] sm:$0xff]
        %v615 = vld [vmem:[%s4 + $0x18] sm:$0xff]
        %617 = vset.pattern.permute.xlu0 0
        %618 = vperm.xlu0 %617, %v612
        %v619 = vpop.permute.xlu0 %618
        %622 = vset.pattern.permute.xlu0 0
        %623 = vperm.xlu0 %622, %v613
        %v624 = vpop.permute.xlu0 %623
        %627 = vset.pattern.permute.xlu0 0
        %628 = vperm.xlu0 %627, %v614
        %v629 = vpop.permute.xlu0 %628
        %632 = vset.pattern.permute.xlu0 0
        %633 = vperm.xlu0 %632, %v615
        %v634 = vpop.permute.xlu0 %633
        %v636 = vmul.f32 %v604, %v619
        %v637 = vmul.f32 %v605, %v619
        %v638 = vmul.f32 %v606, %v624
        %v639 = vmul.f32 %v607, %v624
        %v640 = vmul.f32 %v608, %v629
        %v641 = vmul.f32 %v609, %v629
        %v642 = vmul.f32 %v610, %v634
        %v643 = vmul.f32 %v611, %v634
        %v644 = vadd.f32 %v636, %v638
        %v645 = vadd.f32 %v644, %v640
        %v646 = vadd.f32 %v645, %v642
        %v647 = vrot.slane %v646, 4
        %v648 = vadd.f32 %v646, %v647
        %v649 = vrot.slane %v648, 2
        %v650 = vadd.f32 %v648, %v649
        %v651 = vrot.slane %v650, 1
        %v652 = vadd.f32 %v650, %v651
        %v653 = vadd.f32 %v637, %v639
        %v654 = vadd.f32 %v653, %v641
        %v655 = vadd.f32 %v654, %v643
        %v656 = vrot.slane %v655, 4
        %v657 = vadd.f32 %v655, %v656
        %v658 = vrot.slane %v657, 2
        %v659 = vadd.f32 %v657, %v658
        %v660 = vrot.slane %v659, 1
        %v661 = vadd.f32 %v659, %v660
        %v662 = vld [vmem:[#allocation2] sm:$0x1]
        %s663 = vtos %v662
        %v664 = vstv %s663
        %v665 = vadd.f32 %v652, %v664
        %v666 = vadd.f32 %v661, %v664
        %v667 = vxor.u32 %v665, 2147483648
        %v668 = vxor.u32 %v666, 2147483648
        %v669 = vmul.f32 %v667, 1.442695
        %v670 = vpow.pop %v669
        %v671 = vmul.f32 %v668, 1.442695
        %v672 = vpow.pop %v671
        %v673 = vadd.f32 %v670, 1.0
        %v674 = vadd.f32 %v672, 1.0
        %v675 = vrcp.pop %v673
        %v676 = vmul.f32 1.0, %v675
        %v677 = vrcp.pop %v674
        %v678 = vmul.f32 1.0, %v677
        %v681 = vcombine.low %v676, %v678
        %v683 = vmul.f32 %v347, %v681
        %684 = vst [vmem:[%s324] sm:$0xff] %v683
        %s685 = sand.u32 %s206, 1
        %s686 = scalar_lea.sflag [#allocation4], %s685
        %s687 = sand.u32 %s206, 1
        %s688 = smul.addr %s687, 8
        %s689 = scalar_lea.vmem [#allocation3], %s688
        // Predicated region
        $region49: #{tpu_custom_call.1} parent=47 // pred_check
          %p690 = pneg %p216
        $region50: #{tpu_custom_call.1} parent=47 // pred_check_branch
          %692 = sbr.rel (%p690) target = $region52
        $region51: #{tpu_custom_call.1} parent=47 // pred_region
          %s693 = smul.u32 2, %s28
          %s695 = ssub.s32 128, 128
          %696 = vsyncadd %s686, %s695
          %s697 = smul.addr %s27, 2
          %s698 = sadd.s32 %s693, %s697
          %s699 = smul.addr %s698, 64
          %s700 = scalar_lea.hbm %s7, %s699
          %s702 = sshll.u32 %s689, 4
          %s703 = int_to_ptr.vmem [resolvable:$true] %s702
          %705 = dma.vmem_to_hbm [thread:$0]  %s703, 128, %s700, %s686
        $region52: #{tpu_custom_call.1} parent=47 // pred_fallthru
          _
      $region48: #{tpu_custom_call.1} parent=5 // pred_fallthru
        _
      %p706 = scmp.le.s32.totalorder 2, %s18
      // Predicated region
      $region53: #{tpu_custom_call.1} parent=5 // pred_check
        %p707 = pneg %p706
      $region54: #{tpu_custom_call.1} parent=5 // pred_check_branch
        %709 = sbr.rel (%p707) target = $region56
      $region55: #{tpu_custom_call.1} parent=5 // pred_region
        %s710 = ssub.s32 %s18, 2
        // Predicated region
        $region57: #{tpu_custom_call.1} parent=55 // pred_check
          %p711 = pneg %p222
        $region58: #{tpu_custom_call.1} parent=55 // pred_check_branch
          %713 = sbr.rel (%p711) target = $region60
        $region59: #{tpu_custom_call.1} parent=55 // pred_region
          %s714 = sand.u32 %s207, 1
          %s715 = scalar_lea.sflag [#allocation4], %s714
          %s716 = sand.u32 %s207, 1
          %s717 = smul.addr %s716, 8
          %s718 = scalar_lea.vmem [#allocation3], %s717
          %719 = dma.done %s715, 128
        $region60: #{tpu_custom_call.1} parent=55 // pred_fallthru
          _
      $region56: #{tpu_custom_call.1} parent=5 // pred_fallthru
        _
    $region6: #{tpu_custom_call.1} parent=1 // loop_footer
      %s22 = sadd.s32 1, %s18
    $region7: #{tpu_custom_call.1} parent=1 // loop_footer_branch
      %17 = sbr.rel target = $region3
    $region8: #{tpu_custom_call.1} parent=1 // loop_exit
      _
    %720 = vsyncpa [#allocation4], 1
    %s721 = scalar_lea.sflag [#allocation4], 1
    %722 = vsyncpa %s721, 1

</llo_original>
